<compile_context>
chip_gen: v6e
topology: v6e:2x2x1
jax: 0.10.0
libtpu: 0.0.40
codegen_flags: <defaults>
</compile_context>

<pallas_src>
import functools

import jax
import jax.numpy as jnp
from jax.experimental import pallas as pl
from jax.experimental.pallas import tpu as pltpu


# ------------------------------ Pallas kernel -------------------------------

def char_rnn_kernel(x_ref, wih_ref, whh_ref, b_ref, wl_ref, bl_ref, o_ref,
                    *, seq_len, batch):
    # x_ref  : (L*B, E) f32 embedded input, time-major (row index = t*B + b)
    # wih_ref: (E, E)  bf16, W_ih^T (pre-transposed)
    # whh_ref: (E, E)  bf16, W_hh^T (pre-transposed)
    # b_ref  : (1, E)  f32, b_ih + b_hh (pre-fused)
    # wl_ref : (E, labels) f32, W_label^T
    # bl_ref : (1, labels) f32
    # o_ref  : (B, labels) f32 logits
    # Hoisted input projection: one lane-dense MXU matmul for ALL timesteps,
    # off the serial critical path of the recurrence.
    gx = (jnp.dot(x_ref[...].astype(jnp.bfloat16), wih_ref[...],
                  preferred_element_type=jnp.float32)
          + b_ref[...])                                            # (L*B, E)

    # h_0 = 0  =>  first step needs no recurrent matmul.
    h = jnp.tanh(gx[0:batch, :])                                   # (B, E)

    # Fully unrolled static recurrence: h_t = tanh(gx_t + h_{t-1} @ W_hh^T).
    for t in range(1, seq_len):
        gh = jnp.dot(h.astype(jnp.bfloat16), whh_ref[...],
                     preferred_element_type=jnp.float32)           # (B, E)
        h = jnp.tanh(gx[t * batch:(t + 1) * batch, :] + gh)

    # Fused label head on the final hidden state (kept resident in vregs).
    o_ref[...] = (jnp.dot(h, wl_ref[...], preferred_element_type=jnp.float32)
                  + bl_ref[...])


# -------------------------------- wrappers ----------------------------------

_VMEM = pl.BlockSpec(memory_space=pltpu.MemorySpace.VMEM)


def char_rnn_forward(x_ids, prepped):
    # x_ids: (B, L) int32 character ids.
    B, L = x_ids.shape
    table = prepped["embedding"]
    E = table.shape[1]
    labels = prepped["b_label"].shape[1]

    # Embedding lookup stays in XLA: a data-dependent gather has no rectangular
    # BlockSpec form.  Gather time-major so per-step gate rows are contiguous.
    # TODO(synk): could be moved in-kernel via a DMA gather if the table grew large.
    flat_ids = jnp.transpose(x_ids).reshape(-1)                    # (L*B,)
    emb = jnp.take(table, flat_ids, axis=0)                        # (L*B, E)

    kernel = functools.partial(char_rnn_kernel, seq_len=L, batch=B)
    return pl.pallas_call(
        kernel,
        out_shape=jax.ShapeDtypeStruct((B, labels), jnp.float32),
        in_specs=[_VMEM] * 6,
        out_specs=_VMEM,
    )(emb, prepped["w_ih_t"], prepped["w_hh_t"], prepped["b_rnn"],
      prepped["w_label_t"], prepped["b_label"])


def prepare_params(params):
    # One-time parameter re-layout (done OUTSIDE the jitted forward): transpose
    # weights for (x @ W^T) form, fuse the two RNN biases, cast recurrent weights
    # to bf16 for the MXU.
    E = params["w_ih"].shape[1]
    return {
        "embedding": params["embedding"].astype(jnp.float32),
        "w_ih_t": jnp.transpose(params["w_ih"]).astype(jnp.bfloat16),     # (E, E)
        "w_hh_t": jnp.transpose(params["w_hh"]).astype(jnp.bfloat16),     # (E, E)
        "b_rnn": (params["b_ih"] + params["b_hh"]).reshape(1, E).astype(jnp.float32),
        "w_label_t": jnp.transpose(params["label_w"]).astype(jnp.float32),  # (E, labels)
        "b_label": params["label_b"].reshape(1, -1).astype(jnp.float32),
    }


# ----------------------------- parameter init --------------------------------

def init_params(key, num_chars=38, embedding_dim=128, labels=2):
    E = embedding_dim
    keys = list(jax.random.split(key, 8))
    it = iter(keys)

    def rn(shape, scale=0.05):
        return scale * jax.random.normal(next(it), shape, jnp.float32)

    return {
        "embedding": rn((num_chars, E)),
        # PyTorch nn.RNN parameter layouts: weight_ih_l0 (H, I), weight_hh_l0 (H, H).
        "w_ih": rn((E, E)),
        "w_hh": rn((E, E)),
        "b_ih": rn((E,)),
        "b_hh": rn((E,)),
        # PyTorch nn.Linear: weight (labels, E), bias (labels,).
        "label_w": rn((labels, E)),
        "label_b": rn((labels,)),
    }


# ----------------------------------- main -------------------------------------

if __name__ == "__main__":
    key = jax.random.PRNGKey(0)
    k_par, k_x = jax.random.split(key)

    params = init_params(k_par, num_chars=38, embedding_dim=128, labels=2)
    prepped = prepare_params(params)          # one-time layout prep, outside jit

    B, L = 2, 16
    x_ids = jax.random.randint(k_x, (B, L), 0, 38, dtype=jnp.int32)

    fwd = jax.jit(char_rnn_forward)
    logits = fwd(x_ids, prepped)
    jax.block_until_ready(logits)

    assert logits.shape == (B, 2), logits.shape
    assert bool(jnp.all(jnp.isfinite(logits)))
    print("KERNEL_OK")
</pallas_src>

<mosaic_0001>
module attributes {stable_mosaic.version = 11 : i64} {
  func.func @char_rnn_kernel(%arg0: memref<32x128xf32, #tpu.memory_space<vmem>>, %arg1: memref<128x128xbf16, #tpu.memory_space<vmem>>, %arg2: memref<128x128xbf16, #tpu.memory_space<vmem>>, %arg3: memref<1x128xf32, #tpu.memory_space<vmem>>, %arg4: memref<128x2xf32, #tpu.memory_space<vmem>>, %arg5: memref<1x2xf32, #tpu.memory_space<vmem>>, %arg6: memref<2x2xf32, #tpu.memory_space<vmem>>) attributes {dimension_semantics = [], scalar_prefetch = 0 : i64, scratch_operands = 0 : i64, tpu.core_type = #tpu.core_type<tc>} {
    %c0 = arith.constant 0 : index
    %c0_0 = arith.constant 0 : index
    %0 = vector.load %arg0[%c0, %c0_0] : memref<32x128xf32, #tpu.memory_space<vmem>>, vector<32x128xf32>
    %1 = arith.truncf %0 : vector<32x128xf32> to vector<32x128xbf16>
    %c0_1 = arith.constant 0 : index
    %c0_2 = arith.constant 0 : index
    %2 = vector.load %arg1[%c0_1, %c0_2] : memref<128x128xbf16, #tpu.memory_space<vmem>>, vector<128x128xbf16>
    %cst = arith.constant dense<0.000000e+00> : vector<32x128xf32>
    %3 = tpu.matmul %1, %2, %cst {dimension_numbers = #tpu.dot_dimension_numbers<[1], [0], [0], [1], [0, 0, 1, 1], [], []>} : vector<32x128xbf16>, vector<128x128xbf16>, vector<32x128xf32> -> vector<32x128xf32>
    %c0_3 = arith.constant 0 : index
    %c0_4 = arith.constant 0 : index
    %4 = vector.load %arg3[%c0_3, %c0_4] : memref<1x128xf32, #tpu.memory_space<vmem>>, vector<1x128xf32>
    %5 = vector.broadcast %4 : vector<1x128xf32> to vector<32x128xf32>
    %6 = arith.addf %3, %5 : vector<32x128xf32>
    %7 = vector.extract_strided_slice %6 {offsets = [0, 0], sizes = [2, 128], strides = [1, 1]} : vector<32x128xf32> to vector<2x128xf32>
    %8 = math.tanh %7 : vector<2x128xf32>
    %9 = arith.truncf %8 : vector<2x128xf32> to vector<2x128xbf16>
    %c0_5 = arith.constant 0 : index
    %c0_6 = arith.constant 0 : index
    %10 = vector.load %arg2[%c0_5, %c0_6] : memref<128x128xbf16, #tpu.memory_space<vmem>>, vector<128x128xbf16>
    %cst_7 = arith.constant dense<0.000000e+00> : vector<2x128xf32>
    %11 = tpu.matmul %9, %10, %cst_7 {dimension_numbers = #tpu.dot_dimension_numbers<[1], [0], [0], [1], [0, 0, 1, 1], [], []>} : vector<2x128xbf16>, vector<128x128xbf16>, vector<2x128xf32> -> vector<2x128xf32>
    %12 = vector.extract_strided_slice %6 {offsets = [2, 0], sizes = [2, 128], strides = [1, 1]} : vector<32x128xf32> to vector<2x128xf32>
    %13 = arith.addf %12, %11 : vector<2x128xf32>
    %14 = math.tanh %13 : vector<2x128xf32>
    %15 = arith.truncf %14 : vector<2x128xf32> to vector<2x128xbf16>
    %c0_8 = arith.constant 0 : index
    %c0_9 = arith.constant 0 : index
    %16 = vector.load %arg2[%c0_8, %c0_9] : memref<128x128xbf16, #tpu.memory_space<vmem>>, vector<128x128xbf16>
    %cst_10 = arith.constant dense<0.000000e+00> : vector<2x128xf32>
    %17 = tpu.matmul %15, %16, %cst_10 {dimension_numbers = #tpu.dot_dimension_numbers<[1], [0], [0], [1], [0, 0, 1, 1], [], []>} : vector<2x128xbf16>, vector<128x128xbf16>, vector<2x128xf32> -> vector<2x128xf32>
    %18 = vector.extract_strided_slice %6 {offsets = [4, 0], sizes = [2, 128], strides = [1, 1]} : vector<32x128xf32> to vector<2x128xf32>
    %19 = arith.addf %18, %17 : vector<2x128xf32>
    %20 = math.tanh %19 : vector<2x128xf32>
    %21 = arith.truncf %20 : vector<2x128xf32> to vector<2x128xbf16>
    %c0_11 = arith.constant 0 : index
    %c0_12 = arith.constant 0 : index
    %22 = vector.load %arg2[%c0_11, %c0_12] : memref<128x128xbf16, #tpu.memory_space<vmem>>, vector<128x128xbf16>
    %cst_13 = arith.constant dense<0.000000e+00> : vector<2x128xf32>
    %23 = tpu.matmul %21, %22, %cst_13 {dimension_numbers = #tpu.dot_dimension_numbers<[1], [0], [0], [1], [0, 0, 1, 1], [], []>} : vector<2x128xbf16>, vector<128x128xbf16>, vector<2x128xf32> -> vector<2x128xf32>
    %24 = vector.extract_strided_slice %6 {offsets = [6, 0], sizes = [2, 128], strides = [1, 1]} : vector<32x128xf32> to vector<2x128xf32>
    %25 = arith.addf %24, %23 : vector<2x128xf32>
    %26 = math.tanh %25 : vector<2x128xf32>
    %27 = arith.truncf %26 : vector<2x128xf32> to vector<2x128xbf16>
    %c0_14 = arith.constant 0 : index
    %c0_15 = arith.constant 0 : index
    %28 = vector.load %arg2[%c0_14, %c0_15] : memref<128x128xbf16, #tpu.memory_space<vmem>>, vector<128x128xbf16>
    %cst_16 = arith.constant dense<0.000000e+00> : vector<2x128xf32>
    %29 = tpu.matmul %27, %28, %cst_16 {dimension_numbers = #tpu.dot_dimension_numbers<[1], [0], [0], [1], [0, 0, 1, 1], [], []>} : vector<2x128xbf16>, vector<128x128xbf16>, vector<2x128xf32> -> vector<2x128xf32>
    %30 = vector.extract_strided_slice %6 {offsets = [8, 0], sizes = [2, 128], strides = [1, 1]} : vector<32x128xf32> to vector<2x128xf32>
    %31 = arith.addf %30, %29 : vector<2x128xf32>
    %32 = math.tanh %31 : vector<2x128xf32>
    %33 = arith.truncf %32 : vector<2x128xf32> to vector<2x128xbf16>
    %c0_17 = arith.constant 0 : index
    %c0_18 = arith.constant 0 : index
    %34 = vector.load %arg2[%c0_17, %c0_18] : memref<128x128xbf16, #tpu.memory_space<vmem>>, vector<128x128xbf16>
    %cst_19 = arith.constant dense<0.000000e+00> : vector<2x128xf32>
    %35 = tpu.matmul %33, %34, %cst_19 {dimension_numbers = #tpu.dot_dimension_numbers<[1], [0], [0], [1], [0, 0, 1, 1], [], []>} : vector<2x128xbf16>, vector<128x128xbf16>, vector<2x128xf32> -> vector<2x128xf32>
    %36 = vector.extract_strided_slice %6 {offsets = [10, 0], sizes = [2, 128], strides = [1, 1]} : vector<32x128xf32> to vector<2x128xf32>
    %37 = arith.addf %36, %35 : vector<2x128xf32>
    %38 = math.tanh %37 : vector<2x128xf32>
    %39 = arith.truncf %38 : vector<2x128xf32> to vector<2x128xbf16>
    %c0_20 = arith.constant 0 : index
    %c0_21 = arith.constant 0 : index
    %40 = vector.load %arg2[%c0_20, %c0_21] : memref<128x128xbf16, #tpu.memory_space<vmem>>, vector<128x128xbf16>
    %cst_22 = arith.constant dense<0.000000e+00> : vector<2x128xf32>
    %41 = tpu.matmul %39, %40, %cst_22 {dimension_numbers = #tpu.dot_dimension_numbers<[1], [0], [0], [1], [0, 0, 1, 1], [], []>} : vector<2x128xbf16>, vector<128x128xbf16>, vector<2x128xf32> -> vector<2x128xf32>
    %42 = vector.extract_strided_slice %6 {offsets = [12, 0], sizes = [2, 128], strides = [1, 1]} : vector<32x128xf32> to vector<2x128xf32>
    %43 = arith.addf %42, %41 : vector<2x128xf32>
    %44 = math.tanh %43 : vector<2x128xf32>
    %45 = arith.truncf %44 : vector<2x128xf32> to vector<2x128xbf16>
    %c0_23 = arith.constant 0 : index
    %c0_24 = arith.constant 0 : index
    %46 = vector.load %arg2[%c0_23, %c0_24] : memref<128x128xbf16, #tpu.memory_space<vmem>>, vector<128x128xbf16>
    %cst_25 = arith.constant dense<0.000000e+00> : vector<2x128xf32>
    %47 = tpu.matmul %45, %46, %cst_25 {dimension_numbers = #tpu.dot_dimension_numbers<[1], [0], [0], [1], [0, 0, 1, 1], [], []>} : vector<2x128xbf16>, vector<128x128xbf16>, vector<2x128xf32> -> vector<2x128xf32>
    %48 = vector.extract_strided_slice %6 {offsets = [14, 0], sizes = [2, 128], strides = [1, 1]} : vector<32x128xf32> to vector<2x128xf32>
    %49 = arith.addf %48, %47 : vector<2x128xf32>
    %50 = math.tanh %49 : vector<2x128xf32>
    %51 = arith.truncf %50 : vector<2x128xf32> to vector<2x128xbf16>
    %c0_26 = arith.constant 0 : index
    %c0_27 = arith.constant 0 : index
    %52 = vector.load %arg2[%c0_26, %c0_27] : memref<128x128xbf16, #tpu.memory_space<vmem>>, vector<128x128xbf16>
    %cst_28 = arith.constant dense<0.000000e+00> : vector<2x128xf32>
    %53 = tpu.matmul %51, %52, %cst_28 {dimension_numbers = #tpu.dot_dimension_numbers<[1], [0], [0], [1], [0, 0, 1, 1], [], []>} : vector<2x128xbf16>, vector<128x128xbf16>, vector<2x128xf32> -> vector<2x128xf32>
    %54 = vector.extract_strided_slice %6 {offsets = [16, 0], sizes = [2, 128], strides = [1, 1]} : vector<32x128xf32> to vector<2x128xf32>
    %55 = arith.addf %54, %53 : vector<2x128xf32>
    %56 = math.tanh %55 : vector<2x128xf32>
    %57 = arith.truncf %56 : vector<2x128xf32> to vector<2x128xbf16>
    %c0_29 = arith.constant 0 : index
    %c0_30 = arith.constant 0 : index
    %58 = vector.load %arg2[%c0_29, %c0_30] : memref<128x128xbf16, #tpu.memory_space<vmem>>, vector<128x128xbf16>
    %cst_31 = arith.constant dense<0.000000e+00> : vector<2x128xf32>
    %59 = tpu.matmul %57, %58, %cst_31 {dimension_numbers = #tpu.dot_dimension_numbers<[1], [0], [0], [1], [0, 0, 1, 1], [], []>} : vector<2x128xbf16>, vector<128x128xbf16>, vector<2x128xf32> -> vector<2x128xf32>
    %60 = vector.extract_strided_slice %6 {offsets = [18, 0], sizes = [2, 128], strides = [1, 1]} : vector<32x128xf32> to vector<2x128xf32>
    %61 = arith.addf %60, %59 : vector<2x128xf32>
    %62 = math.tanh %61 : vector<2x128xf32>
    %63 = arith.truncf %62 : vector<2x128xf32> to vector<2x128xbf16>
    %c0_32 = arith.constant 0 : index
    %c0_33 = arith.constant 0 : index
    %64 = vector.load %arg2[%c0_32, %c0_33] : memref<128x128xbf16, #tpu.memory_space<vmem>>, vector<128x128xbf16>
    %cst_34 = arith.constant dense<0.000000e+00> : vector<2x128xf32>
    %65 = tpu.matmul %63, %64, %cst_34 {dimension_numbers = #tpu.dot_dimension_numbers<[1], [0], [0], [1], [0, 0, 1, 1], [], []>} : vector<2x128xbf16>, vector<128x128xbf16>, vector<2x128xf32> -> vector<2x128xf32>
    %66 = vector.extract_strided_slice %6 {offsets = [20, 0], sizes = [2, 128], strides = [1, 1]} : vector<32x128xf32> to vector<2x128xf32>
    %67 = arith.addf %66, %65 : vector<2x128xf32>
    %68 = math.tanh %67 : vector<2x128xf32>
    %69 = arith.truncf %68 : vector<2x128xf32> to vector<2x128xbf16>
    %c0_35 = arith.constant 0 : index
    %c0_36 = arith.constant 0 : index
    %70 = vector.load %arg2[%c0_35, %c0_36] : memref<128x128xbf16, #tpu.memory_space<vmem>>, vector<128x128xbf16>
    %cst_37 = arith.constant dense<0.000000e+00> : vector<2x128xf32>
    %71 = tpu.matmul %69, %70, %cst_37 {dimension_numbers = #tpu.dot_dimension_numbers<[1], [0], [0], [1], [0, 0, 1, 1], [], []>} : vector<2x128xbf16>, vector<128x128xbf16>, vector<2x128xf32> -> vector<2x128xf32>
    %72 = vector.extract_strided_slice %6 {offsets = [22, 0], sizes = [2, 128], strides = [1, 1]} : vector<32x128xf32> to vector<2x128xf32>
    %73 = arith.addf %72, %71 : vector<2x128xf32>
    %74 = math.tanh %73 : vector<2x128xf32>
    %75 = arith.truncf %74 : vector<2x128xf32> to vector<2x128xbf16>
    %c0_38 = arith.constant 0 : index
    %c0_39 = arith.constant 0 : index
    %76 = vector.load %arg2[%c0_38, %c0_39] : memref<128x128xbf16, #tpu.memory_space<vmem>>, vector<128x128xbf16>
    %cst_40 = arith.constant dense<0.000000e+00> : vector<2x128xf32>
    %77 = tpu.matmul %75, %76, %cst_40 {dimension_numbers = #tpu.dot_dimension_numbers<[1], [0], [0], [1], [0, 0, 1, 1], [], []>} : vector<2x128xbf16>, vector<128x128xbf16>, vector<2x128xf32> -> vector<2x128xf32>
    %78 = vector.extract_strided_slice %6 {offsets = [24, 0], sizes = [2, 128], strides = [1, 1]} : vector<32x128xf32> to vector<2x128xf32>
    %79 = arith.addf %78, %77 : vector<2x128xf32>
    %80 = math.tanh %79 : vector<2x128xf32>
    %81 = arith.truncf %80 : vector<2x128xf32> to vector<2x128xbf16>
    %c0_41 = arith.constant 0 : index
    %c0_42 = arith.constant 0 : index
    %82 = vector.load %arg2[%c0_41, %c0_42] : memref<128x128xbf16, #tpu.memory_space<vmem>>, vector<128x128xbf16>
    %cst_43 = arith.constant dense<0.000000e+00> : vector<2x128xf32>
    %83 = tpu.matmul %81, %82, %cst_43 {dimension_numbers = #tpu.dot_dimension_numbers<[1], [0], [0], [1], [0, 0, 1, 1], [], []>} : vector<2x128xbf16>, vector<128x128xbf16>, vector<2x128xf32> -> vector<2x128xf32>
    %84 = vector.extract_strided_slice %6 {offsets = [26, 0], sizes = [2, 128], strides = [1, 1]} : vector<32x128xf32> to vector<2x128xf32>
    %85 = arith.addf %84, %83 : vector<2x128xf32>
    %86 = math.tanh %85 : vector<2x128xf32>
    %87 = arith.truncf %86 : vector<2x128xf32> to vector<2x128xbf16>
    %c0_44 = arith.constant 0 : index
    %c0_45 = arith.constant 0 : index
    %88 = vector.load %arg2[%c0_44, %c0_45] : memref<128x128xbf16, #tpu.memory_space<vmem>>, vector<128x128xbf16>
    %cst_46 = arith.constant dense<0.000000e+00> : vector<2x128xf32>
    %89 = tpu.matmul %87, %88, %cst_46 {dimension_numbers = #tpu.dot_dimension_numbers<[1], [0], [0], [1], [0, 0, 1, 1], [], []>} : vector<2x128xbf16>, vector<128x128xbf16>, vector<2x128xf32> -> vector<2x128xf32>
    %90 = vector.extract_strided_slice %6 {offsets = [28, 0], sizes = [2, 128], strides = [1, 1]} : vector<32x128xf32> to vector<2x128xf32>
    %91 = arith.addf %90, %89 : vector<2x128xf32>
    %92 = math.tanh %91 : vector<2x128xf32>
    %93 = arith.truncf %92 : vector<2x128xf32> to vector<2x128xbf16>
    %c0_47 = arith.constant 0 : index
    %c0_48 = arith.constant 0 : index
    %94 = vector.load %arg2[%c0_47, %c0_48] : memref<128x128xbf16, #tpu.memory_space<vmem>>, vector<128x128xbf16>
    %cst_49 = arith.constant dense<0.000000e+00> : vector<2x128xf32>
    %95 = tpu.matmul %93, %94, %cst_49 {dimension_numbers = #tpu.dot_dimension_numbers<[1], [0], [0], [1], [0, 0, 1, 1], [], []>} : vector<2x128xbf16>, vector<128x128xbf16>, vector<2x128xf32> -> vector<2x128xf32>
    %96 = vector.extract_strided_slice %6 {offsets = [30, 0], sizes = [2, 128], strides = [1, 1]} : vector<32x128xf32> to vector<2x128xf32>
    %97 = arith.addf %96, %95 : vector<2x128xf32>
    %98 = math.tanh %97 : vector<2x128xf32>
    %c0_50 = arith.constant 0 : index
    %c0_51 = arith.constant 0 : index
    %99 = vector.load %arg4[%c0_50, %c0_51] : memref<128x2xf32, #tpu.memory_space<vmem>>, vector<128x2xf32>
    %cst_52 = arith.constant dense<0.000000e+00> : vector<2x2xf32>
    %100 = tpu.matmul %98, %99, %cst_52 {dimension_numbers = #tpu.dot_dimension_numbers<[1], [0], [0], [1], [0, 0, 1, 1], [], []>} : vector<2x128xf32>, vector<128x2xf32>, vector<2x2xf32> -> vector<2x2xf32>
    %c0_53 = arith.constant 0 : index
    %c0_54 = arith.constant 0 : index
    %101 = vector.load %arg5[%c0_53, %c0_54] : memref<1x2xf32, #tpu.memory_space<vmem>>, vector<1x2xf32>
    %102 = vector.broadcast %101 : vector<1x2xf32> to vector<2x2xf32>
    %103 = arith.addf %100, %102 : vector<2x2xf32>
    %c0_55 = arith.constant 0 : index
    %c0_56 = arith.constant 0 : index
    %104 = vector.load %arg6[%c0_55, %c0_56] : memref<2x2xf32, #tpu.memory_space<vmem>>, vector<2x2xf32>
    tpu.vector_store %arg6[%c0_55, %c0_56], %103 {strides = array<i32>} : memref<2x2xf32, #tpu.memory_space<vmem>>, vector<2x2xf32>,
    return
  }
}

</mosaic_0001>

<llo_original>
// kernel: char_rnn_forward.1
$region0: #{char_rnn_forward.1}
  #allocation0 [shape = 'u32[]', space=smem, size = 0x4, offset = 0x4, fixed_abs, tag = 'smem constant byte address 0x4 - core index']
  #allocation1 [shape = 'u32[144,128]{1,0:T(1,128)}', space=vmem, size = 0x12000, scoped, tag = 'internal scratch']
  %s0 = inlined_call_operand.vmem [shape: f32[32,128], index: 0, kind: input, shape index: {}]
  %s1 = inlined_call_operand.vmem [shape: bf16[128,128], index: 1, kind: input, shape index: {}]
  %s2 = inlined_call_operand.vmem [shape: bf16[128,128], index: 2, kind: input, shape index: {}]
  %s3 = inlined_call_operand.vmem [shape: f32[1,128], index: 3, kind: input, shape index: {}]
  %s4 = inlined_call_operand.vmem [shape: f32[128,2], index: 4, kind: input, shape index: {}]
  %s5 = inlined_call_operand.vmem [shape: f32[1,2], index: 5, kind: input, shape index: {}]
  %s6 = inlined_call_operand.hbm [shape: f32[2,2], index: 6, kind: output, shape index: {}]
  %s7 = sld [smem:[#allocation0]]
  $region34: #{char_rnn_forward.1} parent=0
    _
  %s9 = ssub.s32 1, %s7
  %s10 = scalar_select 0, %s9, %s7
  $region1: #{char_rnn_forward.1} parent=0
    #allocation2 [shape = 'u8[1024]{0}', space=vmem, size = 0x400, scoped, tag = 'output window, operand 0, single buffered']
    #allocation3 [shape = 's32[1]{0}', space=sflag, size = 0x4, scoped, tag = 'scoped memory for char_rnn_forward.1']
    %11 = vsyncpa [#allocation3], 0
    // Predicated region
    $region2: #{char_rnn_forward.1} parent=1 // pred_check
      _
    $region3: #{char_rnn_forward.1} parent=1 // pred_check_branch
      %13 = sbr.rel (0) target = $region5
    $region4: #{char_rnn_forward.1} parent=1 // pred_region
      _
    $region5: #{char_rnn_forward.1} parent=1 // pred_fallthru
      _
    // Predicated region
    $region6: #{char_rnn_forward.1} parent=1 // pred_check
      _
    $region7: #{char_rnn_forward.1} parent=1 // pred_check_branch
      %15 = sbr.rel (0) target = $region9
    $region8: #{char_rnn_forward.1} parent=1 // pred_region
      _
    $region9: #{char_rnn_forward.1} parent=1 // pred_fallthru
      _
    // Predicated region
    $region10: #{char_rnn_forward.1} parent=1 // pred_check
      _
    $region11: #{char_rnn_forward.1} parent=1 // pred_check_branch
      %17 = sbr.rel (0) target = $region13
    $region12: #{char_rnn_forward.1} parent=1 // pred_region
      _
    $region13: #{char_rnn_forward.1} parent=1 // pred_fallthru
      _
    // Predicated region
    $region14: #{char_rnn_forward.1} parent=1 // pred_check
      _
    $region15: #{char_rnn_forward.1} parent=1 // pred_check_branch
      %19 = sbr.rel (0) target = $region17
    $region16: #{char_rnn_forward.1} parent=1 // pred_region
      _
    $region17: #{char_rnn_forward.1} parent=1 // pred_fallthru
      _
    // Predicated region
    $region18: #{char_rnn_forward.1} parent=1 // pred_check
      _
    $region19: #{char_rnn_forward.1} parent=1 // pred_check_branch
      %21 = sbr.rel (0) target = $region21
    $region20: #{char_rnn_forward.1} parent=1 // pred_region
      _
    $region21: #{char_rnn_forward.1} parent=1 // pred_fallthru
      _
    // Predicated region
    $region22: #{char_rnn_forward.1} parent=1 // pred_check
      _
    $region23: #{char_rnn_forward.1} parent=1 // pred_check_branch
      %23 = sbr.rel (0) target = $region25
    $region24: #{char_rnn_forward.1} parent=1 // pred_region
      _
    $region25: #{char_rnn_forward.1} parent=1 // pred_fallthru
      _
    %v25 = vld [vmem:[%s0] sm:$0xff]
    %v26 = vld [vmem:[%s0 + $0x8] sm:$0xff]
    %v27 = vld [vmem:[%s0 + $0x10] sm:$0xff]
    %v28 = vld [vmem:[%s0 + $0x18] sm:$0xff]
    %v29 = vpack.c.bf16 %v26, %v25
    %v30 = vpack.c.bf16 %v28, %v27
    %v31 = vld [vmem:[%s1] sm:$0xf]
    %v32 = vld [vmem:[%s1 + $0x4] sm:$0xf]
    %v33 = vld [vmem:[%s1 + $0x8] sm:$0xf]
    %v34 = vld [vmem:[%s1 + $0xc] sm:$0xf]
    %v35 = vld [vmem:[%s1 + $0x10] sm:$0xf]
    %v36 = vld [vmem:[%s1 + $0x14] sm:$0xf]
    %v37 = vld [vmem:[%s1 + $0x18] sm:$0xf]
    %v38 = vld [vmem:[%s1 + $0x1c] sm:$0xf]
    %v39 = vld [vmem:[%s1 + $0x20] sm:$0xf]
    %v40 = vld [vmem:[%s1 + $0x24] sm:$0xf]
    %v41 = vld [vmem:[%s1 + $0x28] sm:$0xf]
    %v42 = vld [vmem:[%s1 + $0x2c] sm:$0xf]
    %v43 = vld [vmem:[%s1 + $0x30] sm:$0xf]
    %v44 = vld [vmem:[%s1 + $0x34] sm:$0xf]
    %v45 = vld [vmem:[%s1 + $0x38] sm:$0xf]
    %v46 = vld [vmem:[%s1 + $0x3c] sm:$0xf]
    %v47 = vld [vmem:[%s3] sm:$0x1]
    %v49 = vlaneseq
    %v50 = vshrl.u32 %v49, 7
    %v51 = vsub.s32 0, %v50
    %v52 = vrot.slane %v47, %v51
    %v70 = vunpack.c.l.b16 %v31
    %v71 = vunpack.c.l.b16 %v32
    %v72 = vunpack.c.l.b16 %v33
    %v73 = vunpack.c.l.b16 %v34
    %v74 = vunpack.c.l.b16 %v35
    %v75 = vunpack.c.l.b16 %v36
    %v76 = vunpack.c.l.b16 %v37
    %v77 = vunpack.c.l.b16 %v38
    %v78 = vunpack.c.l.b16 %v39
    %v79 = vunpack.c.l.b16 %v40
    %v80 = vunpack.c.l.b16 %v41
    %v81 = vunpack.c.l.b16 %v42
    %v82 = vunpack.c.l.b16 %v43
    %v83 = vunpack.c.l.b16 %v44
    %v84 = vunpack.c.l.b16 %v45
    %v85 = vunpack.c.l.b16 %v46
    %v86 = vpack.c.b16 %v71, %v70
    %v87 = vpack.c.b16 %v73, %v72
    %v88 = vpack.c.b16 %v75, %v74
    %v89 = vpack.c.b16 %v77, %v76
    %v90 = vpack.c.b16 %v79, %v78
    %v91 = vpack.c.b16 %v81, %v80
    %v92 = vpack.c.b16 %v83, %v82
    %v93 = vpack.c.b16 %v85, %v84
    %102 = vmatprep.subr.bf16.mxu0 0
    %103 = vmatpush1.bf16.msra.mxu0 %v93
    %104 = vmatprep.subr.bf16.mxu0 0
    %105 = vmatpush1.bf16.msra.mxu0 %v92
    %106 = vmatprep.subr.bf16.mxu0 0
    %107 = vmatpush1.bf16.msra.mxu0 %v91
    %108 = vmatprep.subr.bf16.mxu0 0
    %109 = vmatpush1.bf16.msra.mxu0 %v90
    %110 = vmatprep.subr.bf16.mxu0 0
    %111 = vmatpush1.bf16.msra.mxu0 %v89
    %112 = vmatprep.subr.bf16.mxu0 0
    %113 = vmatpush1.bf16.msra.mxu0 %v88
    %114 = vmatprep.subr.bf16.mxu0 0
    %115 = vmatpush1.bf16.msra.mxu0 %v87
    %116 = vmatprep.subr.bf16.mxu0 0
    %117 = vmatpush1.bf16.msra.mxu0 %v86
    %118 = vmatprep.subr.bf16.mxu0 0
    %119 = vmatpush2.bf16.msra.mxu0 0
    %120 = vmatprep.subr.bf16.mxu0 0
    %121 = vmatpush2.bf16.msra.mxu0 0
    %122 = vmatprep.subr.bf16.mxu0 0
    %123 = vmatpush2.bf16.msra.mxu0 0
    %124 = vmatprep.subr.bf16.mxu0 0
    %125 = vmatpush2.bf16.msra.mxu0 0
    %126 = vmatprep.subr.bf16.mxu0 0
    %127 = vmatpush2.bf16.msra.mxu0 0
    %128 = vmatprep.subr.bf16.mxu0 0
    %129 = vmatpush2.bf16.msra.mxu0 0
    %130 = vmatprep.subr.bf16.mxu0 0
    %131 = vmatpush2.bf16.msra.mxu0 0
    %132 = vmatprep.subr.bf16.mxu0 0
    %133 = vmatpush2.bf16.msra.mxu0 0
    %134 = vmatprep.mubr.bf16.mxu0 0
    %135 = vmatmul.mubr.bf16.gmra.mxu0 %v29
    %v136 = vpop.f32.mrf.mxu0
    %v137 = vadd.f32 %v52, %v136
    %v138 = vpop.f32.mrf.mxu0
    %v139 = vpop.f32.mrf.mxu0
    %v140 = vadd.f32 %v52, %v139
    %v141 = vpop.f32.mrf.mxu0
    %142 = vmatprep.mubr.bf16.mxu0 0
    %143 = vmatmul.mubr.bf16.gmra.mxu0 %v30
    %v144 = vpop.f32.mrf.mxu0
    %v145 = vadd.f32 %v52, %v144
    %v146 = vpop.f32.mrf.mxu0
    %v147 = vpop.f32.mrf.mxu0
    %v148 = vadd.f32 %v52, %v147
    %v149 = vpop.f32.mrf.mxu0
    %150 = vdwg.mxu0
    %v151 = vtanh.pop %v137
    %v152 = vpack.c.bf16 %v151, %v151
    %v153 = vld [vmem:[%s2] sm:$0xf]
    %v154 = vld [vmem:[%s2 + $0x4] sm:$0xf]
    %v155 = vld [vmem:[%s2 + $0x8] sm:$0xf]
    %v156 = vld [vmem:[%s2 + $0xc] sm:$0xf]
    %v157 = vld [vmem:[%s2 + $0x10] sm:$0xf]
    %v158 = vld [vmem:[%s2 + $0x14] sm:$0xf]
    %v159 = vld [vmem:[%s2 + $0x18] sm:$0xf]
    %v160 = vld [vmem:[%s2 + $0x1c] sm:$0xf]
    %v161 = vld [vmem:[%s2 + $0x20] sm:$0xf]
    %v162 = vld [vmem:[%s2 + $0x24] sm:$0xf]
    %v163 = vld [vmem:[%s2 + $0x28] sm:$0xf]
    %v164 = vld [vmem:[%s2 + $0x2c] sm:$0xf]
    %v165 = vld [vmem:[%s2 + $0x30] sm:$0xf]
    %v166 = vld [vmem:[%s2 + $0x34] sm:$0xf]
    %v167 = vld [vmem:[%s2 + $0x38] sm:$0xf]
    %v168 = vld [vmem:[%s2 + $0x3c] sm:$0xf]
    %v185 = vunpack.c.l.b16 %v153
    %v186 = vunpack.c.l.b16 %v154
    %v187 = vunpack.c.l.b16 %v155
    %v188 = vunpack.c.l.b16 %v156
    %v189 = vunpack.c.l.b16 %v157
    %v190 = vunpack.c.l.b16 %v158
    %v191 = vunpack.c.l.b16 %v159
    %v192 = vunpack.c.l.b16 %v160
    %v193 = vunpack.c.l.b16 %v161
    %v194 = vunpack.c.l.b16 %v162
    %v195 = vunpack.c.l.b16 %v163
    %v196 = vunpack.c.l.b16 %v164
    %v197 = vunpack.c.l.b16 %v165
    %v198 = vunpack.c.l.b16 %v166
    %v199 = vunpack.c.l.b16 %v167
    %v200 = vunpack.c.l.b16 %v168
    %v201 = vpack.c.b16 %v186, %v185
    %v202 = vpack.c.b16 %v188, %v187
    %v203 = vpack.c.b16 %v190, %v189
    %v204 = vpack.c.b16 %v192, %v191
    %v205 = vpack.c.b16 %v194, %v193
    %v206 = vpack.c.b16 %v196, %v195
    %v207 = vpack.c.b16 %v198, %v197
    %v208 = vpack.c.b16 %v200, %v199
    %217 = vmatprep.subr.bf16.mxu0 0
    %218 = vmatpush1.bf16.msra.mxu0 %v208
    %219 = vmatprep.subr.bf16.mxu0 0
    %220 = vmatpush1.bf16.msra.mxu0 %v207
    %221 = vmatprep.subr.bf16.mxu0 0
    %222 = vmatpush1.bf16.msra.mxu0 %v206
    %223 = vmatprep.subr.bf16.mxu0 0
    %224 = vmatpush1.bf16.msra.mxu0 %v205
    %225 = vmatprep.subr.bf16.mxu0 0
    %226 = vmatpush1.bf16.msra.mxu0 %v204
    %227 = vmatprep.subr.bf16.mxu0 0
    %228 = vmatpush1.bf16.msra.mxu0 %v203
    %229 = vmatprep.subr.bf16.mxu0 0
    %230 = vmatpush1.bf16.msra.mxu0 %v202
    %231 = vmatprep.subr.bf16.mxu0 0
    %232 = vmatpush1.bf16.msra.mxu0 %v201
    %233 = vmatprep.subr.bf16.mxu0 0
    %234 = vmatpush2.bf16.msra.mxu0 0
    %235 = vmatprep.subr.bf16.mxu0 0
    %236 = vmatpush2.bf16.msra.mxu0 0
    %237 = vmatprep.subr.bf16.mxu0 0
    %238 = vmatpush2.bf16.msra.mxu0 0
    %239 = vmatprep.subr.bf16.mxu0 0
    %240 = vmatpush2.bf16.msra.mxu0 0
    %241 = vmatprep.subr.bf16.mxu0 0
    %242 = vmatpush2.bf16.msra.mxu0 0
    %243 = vmatprep.subr.bf16.mxu0 0
    %244 = vmatpush2.bf16.msra.mxu0 0
    %245 = vmatprep.subr.bf16.mxu0 0
    %246 = vmatpush2.bf16.msra.mxu0 0
    %247 = vmatprep.subr.bf16.mxu0 0
    %248 = vmatpush2.bf16.msra.mxu0 0
    %249 = vmatprep.mubr.bf16.mxu0 0
    %250 = vmatmul.mubr.bf16.gmra.mxu0 %v152
    %v251 = vpop.f32.mrf.mxu0
    %v252 = vadd.f32 0.0, %v251
    %v253 = vpop.f32.mrf.mxu0
    %v254 = vpop.f32.mrf.mxu0
    %v255 = vpop.f32.mrf.mxu0
    %256 = vdwg.mxu0
    %v258 = vrot.slane %v252, 6
    %v260 = vadd.f32 %v137, %v258
    %v261 = vtanh.pop %v260
    %v262 = vpack.c.bf16 %v261, %v261
    %v264 = vrot.slane %v262, 1
    %266 = vmatprep.subr.bf16.mxu0 0
    %267 = vmatpush1.bf16.msra.mxu0 %v208
    %268 = vmatprep.subr.bf16.mxu0 0
    %269 = vmatpush1.bf16.msra.mxu0 %v207
    %270 = vmatprep.subr.bf16.mxu0 0
    %271 = vmatpush1.bf16.msra.mxu0 %v206
    %272 = vmatprep.subr.bf16.mxu0 0
    %273 = vmatpush1.bf16.msra.mxu0 %v205
    %274 = vmatprep.subr.bf16.mxu0 0
    %275 = vmatpush1.bf16.msra.mxu0 %v204
    %276 = vmatprep.subr.bf16.mxu0 0
    %277 = vmatpush1.bf16.msra.mxu0 %v203
    %278 = vmatprep.subr.bf16.mxu0 0
    %279 = vmatpush1.bf16.msra.mxu0 %v202
    %280 = vmatprep.subr.bf16.mxu0 0
    %281 = vmatpush1.bf16.msra.mxu0 %v201
    %282 = vmatprep.subr.bf16.mxu0 0
    %283 = vmatpush2.bf16.msra.mxu0 0
    %284 = vmatprep.subr.bf16.mxu0 0
    %285 = vmatpush2.bf16.msra.mxu0 0
    %286 = vmatprep.subr.bf16.mxu0 0
    %287 = vmatpush2.bf16.msra.mxu0 0
    %288 = vmatprep.subr.bf16.mxu0 0
    %289 = vmatpush2.bf16.msra.mxu0 0
    %290 = vmatprep.subr.bf16.mxu0 0
    %291 = vmatpush2.bf16.msra.mxu0 0
    %292 = vmatprep.subr.bf16.mxu0 0
    %293 = vmatpush2.bf16.msra.mxu0 0
    %294 = vmatprep.subr.bf16.mxu0 0
    %295 = vmatpush2.bf16.msra.mxu0 0
    %296 = vmatprep.subr.bf16.mxu0 0
    %297 = vmatpush2.bf16.msra.mxu0 0
    %298 = vmatprep.mubr.bf16.mxu0 0
    %299 = vmatmul.mubr.bf16.gmra.mxu0 %v264
    %v300 = vpop.f32.mrf.mxu0
    %v301 = vadd.f32 0.0, %v300
    %v302 = vpop.f32.mrf.mxu0
    %v303 = vpop.f32.mrf.mxu0
    %v304 = vpop.f32.mrf.mxu0
    %305 = vdwg.mxu0
    %v307 = vrot.slane %v301, 4
    %v309 = vadd.f32 %v137, %v307
    %v310 = vtanh.pop %v309
    %v311 = vpack.c.bf16 %v310, %v310
    %v313 = vrot.slane %v311, 2
    %315 = vmatprep.subr.bf16.mxu0 0
    %316 = vmatpush1.bf16.msra.mxu0 %v208
    %317 = vmatprep.subr.bf16.mxu0 0
    %318 = vmatpush1.bf16.msra.mxu0 %v207
    %319 = vmatprep.subr.bf16.mxu0 0
    %320 = vmatpush1.bf16.msra.mxu0 %v206
    %321 = vmatprep.subr.bf16.mxu0 0
    %322 = vmatpush1.bf16.msra.mxu0 %v205
    %323 = vmatprep.subr.bf16.mxu0 0
    %324 = vmatpush1.bf16.msra.mxu0 %v204
    %325 = vmatprep.subr.bf16.mxu0 0
    %326 = vmatpush1.bf16.msra.mxu0 %v203
    %327 = vmatprep.subr.bf16.mxu0 0
    %328 = vmatpush1.bf16.msra.mxu0 %v202
    %329 = vmatprep.subr.bf16.mxu0 0
    %330 = vmatpush1.bf16.msra.mxu0 %v201
    %331 = vmatprep.subr.bf16.mxu0 0
    %332 = vmatpush2.bf16.msra.mxu0 0
    %333 = vmatprep.subr.bf16.mxu0 0
    %334 = vmatpush2.bf16.msra.mxu0 0
    %335 = vmatprep.subr.bf16.mxu0 0
    %336 = vmatpush2.bf16.msra.mxu0 0
    %337 = vmatprep.subr.bf16.mxu0 0
    %338 = vmatpush2.bf16.msra.mxu0 0
    %339 = vmatprep.subr.bf16.mxu0 0
    %340 = vmatpush2.bf16.msra.mxu0 0
    %341 = vmatprep.subr.bf16.mxu0 0
    %342 = vmatpush2.bf16.msra.mxu0 0
    %343 = vmatprep.subr.bf16.mxu0 0
    %344 = vmatpush2.bf16.msra.mxu0 0
    %345 = vmatprep.subr.bf16.mxu0 0
    %346 = vmatpush2.bf16.msra.mxu0 0
    %347 = vmatprep.mubr.bf16.mxu0 0
    %348 = vmatmul.mubr.bf16.gmra.mxu0 %v313
    %v349 = vpop.f32.mrf.mxu0
    %v350 = vadd.f32 0.0, %v349
    %v351 = vpop.f32.mrf.mxu0
    %v352 = vpop.f32.mrf.mxu0
    %v353 = vpop.f32.mrf.mxu0
    %354 = vdwg.mxu0
    %v356 = vrot.slane %v350, 2
    %v358 = vadd.f32 %v137, %v356
    %v359 = vtanh.pop %v358
    %v360 = vpack.c.bf16 %v359, %v359
    %v362 = vrot.slane %v360, 3
    %364 = vmatprep.subr.bf16.mxu0 0
    %365 = vmatpush1.bf16.msra.mxu0 %v208
    %366 = vmatprep.subr.bf16.mxu0 0
    %367 = vmatpush1.bf16.msra.mxu0 %v207
    %368 = vmatprep.subr.bf16.mxu0 0
    %369 = vmatpush1.bf16.msra.mxu0 %v206
    %370 = vmatprep.subr.bf16.mxu0 0
    %371 = vmatpush1.bf16.msra.mxu0 %v205
    %372 = vmatprep.subr.bf16.mxu0 0
    %373 = vmatpush1.bf16.msra.mxu0 %v204
    %374 = vmatprep.subr.bf16.mxu0 0
    %375 = vmatpush1.bf16.msra.mxu0 %v203
    %376 = vmatprep.subr.bf16.mxu0 0
    %377 = vmatpush1.bf16.msra.mxu0 %v202
    %378 = vmatprep.subr.bf16.mxu0 0
    %379 = vmatpush1.bf16.msra.mxu0 %v201
    %380 = vmatprep.subr.bf16.mxu0 0
    %381 = vmatpush2.bf16.msra.mxu0 0
    %382 = vmatprep.subr.bf16.mxu0 0
    %383 = vmatpush2.bf16.msra.mxu0 0
    %384 = vmatprep.subr.bf16.mxu0 0
    %385 = vmatpush2.bf16.msra.mxu0 0
    %386 = vmatprep.subr.bf16.mxu0 0
    %387 = vmatpush2.bf16.msra.mxu0 0
    %388 = vmatprep.subr.bf16.mxu0 0
    %389 = vmatpush2.bf16.msra.mxu0 0
    %390 = vmatprep.subr.bf16.mxu0 0
    %391 = vmatpush2.bf16.msra.mxu0 0
    %392 = vmatprep.subr.bf16.mxu0 0
    %393 = vmatpush2.bf16.msra.mxu0 0
    %394 = vmatprep.subr.bf16.mxu0 0
    %395 = vmatpush2.bf16.msra.mxu0 0
    %396 = vmatprep.mubr.bf16.mxu0 0
    %397 = vmatmul.mubr.bf16.gmra.mxu0 %v362
    %v398 = vpop.f32.mrf.mxu0
    %v399 = vadd.f32 0.0, %v398
    %v400 = vpop.f32.mrf.mxu0
    %v401 = vpop.f32.mrf.mxu0
    %v402 = vpop.f32.mrf.mxu0
    %403 = vdwg.mxu0
    %v404 = vadd.f32 %v140, %v399
    %v405 = vtanh.pop %v404
    %v406 = vpack.c.bf16 %v405, %v405
    %407 = vmatprep.subr.bf16.mxu0 0
    %408 = vmatpush1.bf16.msra.mxu0 %v208
    %409 = vmatprep.subr.bf16.mxu0 0
    %410 = vmatpush1.bf16.msra.mxu0 %v207
    %411 = vmatprep.subr.bf16.mxu0 0
    %412 = vmatpush1.bf16.msra.mxu0 %v206
    %413 = vmatprep.subr.bf16.mxu0 0
    %414 = vmatpush1.bf16.msra.mxu0 %v205
    %415 = vmatprep.subr.bf16.mxu0 0
    %416 = vmatpush1.bf16.msra.mxu0 %v204
    %417 = vmatprep.subr.bf16.mxu0 0
    %418 = vmatpush1.bf16.msra.mxu0 %v203
    %419 = vmatprep.subr.bf16.mxu0 0
    %420 = vmatpush1.bf16.msra.mxu0 %v202
    %421 = vmatprep.subr.bf16.mxu0 0
    %422 = vmatpush1.bf16.msra.mxu0 %v201
    %423 = vmatprep.subr.bf16.mxu0 0
    %424 = vmatpush2.bf16.msra.mxu0 0
    %425 = vmatprep.subr.bf16.mxu0 0
    %426 = vmatpush2.bf16.msra.mxu0 0
    %427 = vmatprep.subr.bf16.mxu0 0
    %428 = vmatpush2.bf16.msra.mxu0 0
    %429 = vmatprep.subr.bf16.mxu0 0
    %430 = vmatpush2.bf16.msra.mxu0 0
    %431 = vmatprep.subr.bf16.mxu0 0
    %432 = vmatpush2.bf16.msra.mxu0 0
    %433 = vmatprep.subr.bf16.mxu0 0
    %434 = vmatpush2.bf16.msra.mxu0 0
    %435 = vmatprep.subr.bf16.mxu0 0
    %436 = vmatpush2.bf16.msra.mxu0 0
    %437 = vmatprep.subr.bf16.mxu0 0
    %438 = vmatpush2.bf16.msra.mxu0 0
    %439 = vmatprep.mubr.bf16.mxu0 0
    %440 = vmatmul.mubr.bf16.gmra.mxu0 %v406
    %v441 = vpop.f32.mrf.mxu0
    %v442 = vadd.f32 0.0, %v441
    %v443 = vpop.f32.mrf.mxu0
    %v444 = vpop.f32.mrf.mxu0
    %v445 = vpop.f32.mrf.mxu0
    %446 = vdwg.mxu0
    %v448 = vrot.slane %v442, 6
    %v450 = vadd.f32 %v140, %v448
    %v451 = vtanh.pop %v450
    %v452 = vpack.c.bf16 %v451, %v451
    %v454 = vrot.slane %v452, 1
    %456 = vmatprep.subr.bf16.mxu0 0
    %457 = vmatpush1.bf16.msra.mxu0 %v208
    %458 = vmatprep.subr.bf16.mxu0 0
    %459 = vmatpush1.bf16.msra.mxu0 %v207
    %460 = vmatprep.subr.bf16.mxu0 0
    %461 = vmatpush1.bf16.msra.mxu0 %v206
    %462 = vmatprep.subr.bf16.mxu0 0
    %463 = vmatpush1.bf16.msra.mxu0 %v205
    %464 = vmatprep.subr.bf16.mxu0 0
    %465 = vmatpush1.bf16.msra.mxu0 %v204
    %466 = vmatprep.subr.bf16.mxu0 0
    %467 = vmatpush1.bf16.msra.mxu0 %v203
    %468 = vmatprep.subr.bf16.mxu0 0
    %469 = vmatpush1.bf16.msra.mxu0 %v202
    %470 = vmatprep.subr.bf16.mxu0 0
    %471 = vmatpush1.bf16.msra.mxu0 %v201
    %472 = vmatprep.subr.bf16.mxu0 0
    %473 = vmatpush2.bf16.msra.mxu0 0
    %474 = vmatprep.subr.bf16.mxu0 0
    %475 = vmatpush2.bf16.msra.mxu0 0
    %476 = vmatprep.subr.bf16.mxu0 0
    %477 = vmatpush2.bf16.msra.mxu0 0
    %478 = vmatprep.subr.bf16.mxu0 0
    %479 = vmatpush2.bf16.msra.mxu0 0
    %480 = vmatprep.subr.bf16.mxu0 0
    %481 = vmatpush2.bf16.msra.mxu0 0
    %482 = vmatprep.subr.bf16.mxu0 0
    %483 = vmatpush2.bf16.msra.mxu0 0
    %484 = vmatprep.subr.bf16.mxu0 0
    %485 = vmatpush2.bf16.msra.mxu0 0
    %486 = vmatprep.subr.bf16.mxu0 0
    %487 = vmatpush2.bf16.msra.mxu0 0
    %488 = vmatprep.mubr.bf16.mxu0 0
    %489 = vmatmul.mubr.bf16.gmra.mxu0 %v454
    %v490 = vpop.f32.mrf.mxu0
    %v491 = vadd.f32 0.0, %v490
    %v492 = vpop.f32.mrf.mxu0
    %v493 = vpop.f32.mrf.mxu0
    %v494 = vpop.f32.mrf.mxu0
    %495 = vdwg.mxu0
    %v497 = vrot.slane %v491, 4
    %v499 = vadd.f32 %v140, %v497
    %v500 = vtanh.pop %v499
    %v501 = vpack.c.bf16 %v500, %v500
    %v503 = vrot.slane %v501, 2
    %505 = vmatprep.subr.bf16.mxu0 0
    %506 = vmatpush1.bf16.msra.mxu0 %v208
    %507 = vmatprep.subr.bf16.mxu0 0
    %508 = vmatpush1.bf16.msra.mxu0 %v207
    %509 = vmatprep.subr.bf16.mxu0 0
    %510 = vmatpush1.bf16.msra.mxu0 %v206
    %511 = vmatprep.subr.bf16.mxu0 0
    %512 = vmatpush1.bf16.msra.mxu0 %v205
    %513 = vmatprep.subr.bf16.mxu0 0
    %514 = vmatpush1.bf16.msra.mxu0 %v204
    %515 = vmatprep.subr.bf16.mxu0 0
    %516 = vmatpush1.bf16.msra.mxu0 %v203
    %517 = vmatprep.subr.bf16.mxu0 0
    %518 = vmatpush1.bf16.msra.mxu0 %v202
    %519 = vmatprep.subr.bf16.mxu0 0
    %520 = vmatpush1.bf16.msra.mxu0 %v201
    %521 = vmatprep.subr.bf16.mxu0 0
    %522 = vmatpush2.bf16.msra.mxu0 0
    %523 = vmatprep.subr.bf16.mxu0 0
    %524 = vmatpush2.bf16.msra.mxu0 0
    %525 = vmatprep.subr.bf16.mxu0 0
    %526 = vmatpush2.bf16.msra.mxu0 0
    %527 = vmatprep.subr.bf16.mxu0 0
    %528 = vmatpush2.bf16.msra.mxu0 0
    %529 = vmatprep.subr.bf16.mxu0 0
    %530 = vmatpush2.bf16.msra.mxu0 0
    %531 = vmatprep.subr.bf16.mxu0 0
    %532 = vmatpush2.bf16.msra.mxu0 0
    %533 = vmatprep.subr.bf16.mxu0 0
    %534 = vmatpush2.bf16.msra.mxu0 0
    %535 = vmatprep.subr.bf16.mxu0 0
    %536 = vmatpush2.bf16.msra.mxu0 0
    %537 = vmatprep.mubr.bf16.mxu0 0
    %538 = vmatmul.mubr.bf16.gmra.mxu0 %v503
    %v539 = vpop.f32.mrf.mxu0
    %v540 = vadd.f32 0.0, %v539
    %v541 = vpop.f32.mrf.mxu0
    %v542 = vpop.f32.mrf.mxu0
    %v543 = vpop.f32.mrf.mxu0
    %544 = vdwg.mxu0
    %v546 = vrot.slane %v540, 2
    %v548 = vadd.f32 %v140, %v546
    %v549 = vtanh.pop %v548
    %v550 = vpack.c.bf16 %v549, %v549
    %v552 = vrot.slane %v550, 3
    %554 = vmatprep.subr.bf16.mxu0 0
    %555 = vmatpush1.bf16.msra.mxu0 %v208
    %556 = vmatprep.subr.bf16.mxu0 0
    %557 = vmatpush1.bf16.msra.mxu0 %v207
    %558 = vmatprep.subr.bf16.mxu0 0
    %559 = vmatpush1.bf16.msra.mxu0 %v206
    %560 = vmatprep.subr.bf16.mxu0 0
    %561 = vmatpush1.bf16.msra.mxu0 %v205
    %562 = vmatprep.subr.bf16.mxu0 0
    %563 = vmatpush1.bf16.msra.mxu0 %v204
    %564 = vmatprep.subr.bf16.mxu0 0
    %565 = vmatpush1.bf16.msra.mxu0 %v203
    %566 = vmatprep.subr.bf16.mxu0 0
    %567 = vmatpush1.bf16.msra.mxu0 %v202
    %568 = vmatprep.subr.bf16.mxu0 0
    %569 = vmatpush1.bf16.msra.mxu0 %v201
    %570 = vmatprep.subr.bf16.mxu0 0
    %571 = vmatpush2.bf16.msra.mxu0 0
    %572 = vmatprep.subr.bf16.mxu0 0
    %573 = vmatpush2.bf16.msra.mxu0 0
    %574 = vmatprep.subr.bf16.mxu0 0
    %575 = vmatpush2.bf16.msra.mxu0 0
    %576 = vmatprep.subr.bf16.mxu0 0
    %577 = vmatpush2.bf16.msra.mxu0 0
    %578 = vmatprep.subr.bf16.mxu0 0
    %579 = vmatpush2.bf16.msra.mxu0 0
    %580 = vmatprep.subr.bf16.mxu0 0
    %581 = vmatpush2.bf16.msra.mxu0 0
    %582 = vmatprep.subr.bf16.mxu0 0
    %583 = vmatpush2.bf16.msra.mxu0 0
    %584 = vmatprep.subr.bf16.mxu0 0
    %585 = vmatpush2.bf16.msra.mxu0 0
    %586 = vmatprep.mubr.bf16.mxu0 0
    %587 = vmatmul.mubr.bf16.gmra.mxu0 %v552
    %v588 = vpop.f32.mrf.mxu0
    %v589 = vadd.f32 0.0, %v588
    %v590 = vpop.f32.mrf.mxu0
    %v591 = vpop.f32.mrf.mxu0
    %v592 = vpop.f32.mrf.mxu0
    %593 = vdwg.mxu0
    %v594 = vadd.f32 %v145, %v589
    %v595 = vtanh.pop %v594
    %v596 = vpack.c.bf16 %v595, %v595
    %597 = vmatprep.subr.bf16.mxu0 0
    %598 = vmatpush1.bf16.msra.mxu0 %v208
    %599 = vmatprep.subr.bf16.mxu0 0
    %600 = vmatpush1.bf16.msra.mxu0 %v207
    %601 = vmatprep.subr.bf16.mxu0 0
    %602 = vmatpush1.bf16.msra.mxu0 %v206
    %603 = vmatprep.subr.bf16.mxu0 0
    %604 = vmatpush1.bf16.msra.mxu0 %v205
    %605 = vmatprep.subr.bf16.mxu0 0
    %606 = vmatpush1.bf16.msra.mxu0 %v204
    %607 = vmatprep.subr.bf16.mxu0 0
    %608 = vmatpush1.bf16.msra.mxu0 %v203
    %609 = vmatprep.subr.bf16.mxu0 0
    %610 = vmatpush1.bf16.msra.mxu0 %v202
    %611 = vmatprep.subr.bf16.mxu0 0
    %612 = vmatpush1.bf16.msra.mxu0 %v201
    %613 = vmatprep.subr.bf16.mxu0 0
    %614 = vmatpush2.bf16.msra.mxu0 0
    %615 = vmatprep.subr.bf16.mxu0 0
    %616 = vmatpush2.bf16.msra.mxu0 0
    %617 = vmatprep.subr.bf16.mxu0 0
    %618 = vmatpush2.bf16.msra.mxu0 0
    %619 = vmatprep.subr.bf16.mxu0 0
    %620 = vmatpush2.bf16.msra.mxu0 0
    %621 = vmatprep.subr.bf16.mxu0 0
    %622 = vmatpush2.bf16.msra.mxu0 0
    %623 = vmatprep.subr.bf16.mxu0 0
    %624 = vmatpush2.bf16.msra.mxu0 0
    %625 = vmatprep.subr.bf16.mxu0 0
    %626 = vmatpush2.bf16.msra.mxu0 0
    %627 = vmatprep.subr.bf16.mxu0 0
    %628 = vmatpush2.bf16.msra.mxu0 0
    %629 = vmatprep.mubr.bf16.mxu0 0
    %630 = vmatmul.mubr.bf16.gmra.mxu0 %v596
    %v631 = vpop.f32.mrf.mxu0
    %v632 = vadd.f32 0.0, %v631
    %v633 = vpop.f32.mrf.mxu0
    %v634 = vpop.f32.mrf.mxu0
    %v635 = vpop.f32.mrf.mxu0
    %636 = vdwg.mxu0
    %v638 = vrot.slane %v632, 6
    %v640 = vadd.f32 %v145, %v638
    %v641 = vtanh.pop %v640
    %v642 = vpack.c.bf16 %v641, %v641
    %v644 = vrot.slane %v642, 1
    %646 = vmatprep.subr.bf16.mxu0 0
    %647 = vmatpush1.bf16.msra.mxu0 %v208
    %648 = vmatprep.subr.bf16.mxu0 0
    %649 = vmatpush1.bf16.msra.mxu0 %v207
    %650 = vmatprep.subr.bf16.mxu0 0
    %651 = vmatpush1.bf16.msra.mxu0 %v206
    %652 = vmatprep.subr.bf16.mxu0 0
    %653 = vmatpush1.bf16.msra.mxu0 %v205
    %654 = vmatprep.subr.bf16.mxu0 0
    %655 = vmatpush1.bf16.msra.mxu0 %v204
    %656 = vmatprep.subr.bf16.mxu0 0
    %657 = vmatpush1.bf16.msra.mxu0 %v203
    %658 = vmatprep.subr.bf16.mxu0 0
    %659 = vmatpush1.bf16.msra.mxu0 %v202
    %660 = vmatprep.subr.bf16.mxu0 0
    %661 = vmatpush1.bf16.msra.mxu0 %v201
    %662 = vmatprep.subr.bf16.mxu0 0
    %663 = vmatpush2.bf16.msra.mxu0 0
    %664 = vmatprep.subr.bf16.mxu0 0
    %665 = vmatpush2.bf16.msra.mxu0 0
    %666 = vmatprep.subr.bf16.mxu0 0
    %667 = vmatpush2.bf16.msra.mxu0 0
    %668 = vmatprep.subr.bf16.mxu0 0
    %669 = vmatpush2.bf16.msra.mxu0 0
    %670 = vmatprep.subr.bf16.mxu0 0
    %671 = vmatpush2.bf16.msra.mxu0 0
    %672 = vmatprep.subr.bf16.mxu0 0
    %673 = vmatpush2.bf16.msra.mxu0 0
    %674 = vmatprep.subr.bf16.mxu0 0
    %675 = vmatpush2.bf16.msra.mxu0 0
    %676 = vmatprep.subr.bf16.mxu0 0
    %677 = vmatpush2.bf16.msra.mxu0 0
    %678 = vmatprep.mubr.bf16.mxu0 0
    %679 = vmatmul.mubr.bf16.gmra.mxu0 %v644
    %v680 = vpop.f32.mrf.mxu0
    %v681 = vadd.f32 0.0, %v680
    %v682 = vpop.f32.mrf.mxu0
    %v683 = vpop.f32.mrf.mxu0
    %v684 = vpop.f32.mrf.mxu0
    %685 = vdwg.mxu0
    %v687 = vrot.slane %v681, 4
    %v689 = vadd.f32 %v145, %v687
    %v690 = vtanh.pop %v689
    %v691 = vpack.c.bf16 %v690, %v690
    %v693 = vrot.slane %v691, 2
    %695 = vmatprep.subr.bf16.mxu0 0
    %696 = vmatpush1.bf16.msra.mxu0 %v208
    %697 = vmatprep.subr.bf16.mxu0 0
    %698 = vmatpush1.bf16.msra.mxu0 %v207
    %699 = vmatprep.subr.bf16.mxu0 0
    %700 = vmatpush1.bf16.msra.mxu0 %v206
    %701 = vmatprep.subr.bf16.mxu0 0
    %702 = vmatpush1.bf16.msra.mxu0 %v205
    %703 = vmatprep.subr.bf16.mxu0 0
    %704 = vmatpush1.bf16.msra.mxu0 %v204
    %705 = vmatprep.subr.bf16.mxu0 0
    %706 = vmatpush1.bf16.msra.mxu0 %v203
    %707 = vmatprep.subr.bf16.mxu0 0
    %708 = vmatpush1.bf16.msra.mxu0 %v202
    %709 = vmatprep.subr.bf16.mxu0 0
    %710 = vmatpush1.bf16.msra.mxu0 %v201
    %711 = vmatprep.subr.bf16.mxu0 0
    %712 = vmatpush2.bf16.msra.mxu0 0
    %713 = vmatprep.subr.bf16.mxu0 0
    %714 = vmatpush2.bf16.msra.mxu0 0
    %715 = vmatprep.subr.bf16.mxu0 0
    %716 = vmatpush2.bf16.msra.mxu0 0
    %717 = vmatprep.subr.bf16.mxu0 0
    %718 = vmatpush2.bf16.msra.mxu0 0
    %719 = vmatprep.subr.bf16.mxu0 0
    %720 = vmatpush2.bf16.msra.mxu0 0
    %721 = vmatprep.subr.bf16.mxu0 0
    %722 = vmatpush2.bf16.msra.mxu0 0
    %723 = vmatprep.subr.bf16.mxu0 0
    %724 = vmatpush2.bf16.msra.mxu0 0
    %725 = vmatprep.subr.bf16.mxu0 0
    %726 = vmatpush2.bf16.msra.mxu0 0
    %727 = vmatprep.mubr.bf16.mxu0 0
    %728 = vmatmul.mubr.bf16.gmra.mxu0 %v693
    %v729 = vpop.f32.mrf.mxu0
    %v730 = vadd.f32 0.0, %v729
    %v731 = vpop.f32.mrf.mxu0
    %v732 = vpop.f32.mrf.mxu0
    %v733 = vpop.f32.mrf.mxu0
    %734 = vdwg.mxu0
    %v736 = vrot.slane %v730, 2
    %v738 = vadd.f32 %v145, %v736
    %v739 = vtanh.pop %v738
    %v740 = vpack.c.bf16 %v739, %v739
    %v742 = vrot.slane %v740, 3
    %744 = vmatprep.subr.bf16.mxu0 0
    %745 = vmatpush1.bf16.msra.mxu0 %v208
    %746 = vmatprep.subr.bf16.mxu0 0
    %747 = vmatpush1.bf16.msra.mxu0 %v207
    %748 = vmatprep.subr.bf16.mxu0 0
    %749 = vmatpush1.bf16.msra.mxu0 %v206
    %750 = vmatprep.subr.bf16.mxu0 0
    %751 = vmatpush1.bf16.msra.mxu0 %v205
    %752 = vmatprep.subr.bf16.mxu0 0
    %753 = vmatpush1.bf16.msra.mxu0 %v204
    %754 = vmatprep.subr.bf16.mxu0 0
    %755 = vmatpush1.bf16.msra.mxu0 %v203
    %756 = vmatprep.subr.bf16.mxu0 0
    %757 = vmatpush1.bf16.msra.mxu0 %v202
    %758 = vmatprep.subr.bf16.mxu0 0
    %759 = vmatpush1.bf16.msra.mxu0 %v201
    %760 = vmatprep.subr.bf16.mxu0 0
    %761 = vmatpush2.bf16.msra.mxu0 0
    %762 = vmatprep.subr.bf16.mxu0 0
    %763 = vmatpush2.bf16.msra.mxu0 0
    %764 = vmatprep.subr.bf16.mxu0 0
    %765 = vmatpush2.bf16.msra.mxu0 0
    %766 = vmatprep.subr.bf16.mxu0 0
    %767 = vmatpush2.bf16.msra.mxu0 0
    %768 = vmatprep.subr.bf16.mxu0 0
    %769 = vmatpush2.bf16.msra.mxu0 0
    %770 = vmatprep.subr.bf16.mxu0 0
    %771 = vmatpush2.bf16.msra.mxu0 0
    %772 = vmatprep.subr.bf16.mxu0 0
    %773 = vmatpush2.bf16.msra.mxu0 0
    %774 = vmatprep.subr.bf16.mxu0 0
    %775 = vmatpush2.bf16.msra.mxu0 0
    %776 = vmatprep.mubr.bf16.mxu0 0
    %777 = vmatmul.mubr.bf16.gmra.mxu0 %v742
    %v778 = vpop.f32.mrf.mxu0
    %v779 = vadd.f32 0.0, %v778
    %v780 = vpop.f32.mrf.mxu0
    %v781 = vpop.f32.mrf.mxu0
    %v782 = vpop.f32.mrf.mxu0
    %783 = vdwg.mxu0
    %v784 = vadd.f32 %v148, %v779
    %v785 = vtanh.pop %v784
    %v786 = vpack.c.bf16 %v785, %v785
    %787 = vmatprep.subr.bf16.mxu0 0
    %788 = vmatpush1.bf16.msra.mxu0 %v208
    %789 = vmatprep.subr.bf16.mxu0 0
    %790 = vmatpush1.bf16.msra.mxu0 %v207
    %791 = vmatprep.subr.bf16.mxu0 0
    %792 = vmatpush1.bf16.msra.mxu0 %v206
    %793 = vmatprep.subr.bf16.mxu0 0
    %794 = vmatpush1.bf16.msra.mxu0 %v205
    %795 = vmatprep.subr.bf16.mxu0 0
    %796 = vmatpush1.bf16.msra.mxu0 %v204
    %797 = vmatprep.subr.bf16.mxu0 0
    %798 = vmatpush1.bf16.msra.mxu0 %v203
    %799 = vmatprep.subr.bf16.mxu0 0
    %800 = vmatpush1.bf16.msra.mxu0 %v202
    %801 = vmatprep.subr.bf16.mxu0 0
    %802 = vmatpush1.bf16.msra.mxu0 %v201
    %803 = vmatprep.subr.bf16.mxu0 0
    %804 = vmatpush2.bf16.msra.mxu0 0
    %805 = vmatprep.subr.bf16.mxu0 0
    %806 = vmatpush2.bf16.msra.mxu0 0
    %807 = vmatprep.subr.bf16.mxu0 0
    %808 = vmatpush2.bf16.msra.mxu0 0
    %809 = vmatprep.subr.bf16.mxu0 0
    %810 = vmatpush2.bf16.msra.mxu0 0
    %811 = vmatprep.subr.bf16.mxu0 0
    %812 = vmatpush2.bf16.msra.mxu0 0
    %813 = vmatprep.subr.bf16.mxu0 0
    %814 = vmatpush2.bf16.msra.mxu0 0
    %815 = vmatprep.subr.bf16.mxu0 0
    %816 = vmatpush2.bf16.msra.mxu0 0
    %817 = vmatprep.subr.bf16.mxu0 0
    %818 = vmatpush2.bf16.msra.mxu0 0
    %819 = vmatprep.mubr.bf16.mxu0 0
    %820 = vmatmul.mubr.bf16.gmra.mxu0 %v786
    %v821 = vpop.f32.mrf.mxu0
    %v822 = vadd.f32 0.0, %v821
    %v823 = vpop.f32.mrf.mxu0
    %v824 = vpop.f32.mrf.mxu0
    %v825 = vpop.f32.mrf.mxu0
    %826 = vdwg.mxu0
    %v828 = vrot.slane %v822, 6
    %v830 = vadd.f32 %v148, %v828
    %v831 = vtanh.pop %v830
    %v832 = vpack.c.bf16 %v831, %v831
    %v834 = vrot.slane %v832, 1
    %836 = vmatprep.subr.bf16.mxu0 0
    %837 = vmatpush1.bf16.msra.mxu0 %v208
    %838 = vmatprep.subr.bf16.mxu0 0
    %839 = vmatpush1.bf16.msra.mxu0 %v207
    %840 = vmatprep.subr.bf16.mxu0 0
    %841 = vmatpush1.bf16.msra.mxu0 %v206
    %842 = vmatprep.subr.bf16.mxu0 0
    %843 = vmatpush1.bf16.msra.mxu0 %v205
    %844 = vmatprep.subr.bf16.mxu0 0
    %845 = vmatpush1.bf16.msra.mxu0 %v204
    %846 = vmatprep.subr.bf16.mxu0 0
    %847 = vmatpush1.bf16.msra.mxu0 %v203
    %848 = vmatprep.subr.bf16.mxu0 0
    %849 = vmatpush1.bf16.msra.mxu0 %v202
    %850 = vmatprep.subr.bf16.mxu0 0
    %851 = vmatpush1.bf16.msra.mxu0 %v201
    %852 = vmatprep.subr.bf16.mxu0 0
    %853 = vmatpush2.bf16.msra.mxu0 0
    %854 = vmatprep.subr.bf16.mxu0 0
    %855 = vmatpush2.bf16.msra.mxu0 0
    %856 = vmatprep.subr.bf16.mxu0 0
    %857 = vmatpush2.bf16.msra.mxu0 0
    %858 = vmatprep.subr.bf16.mxu0 0
    %859 = vmatpush2.bf16.msra.mxu0 0
    %860 = vmatprep.subr.bf16.mxu0 0
    %861 = vmatpush2.bf16.msra.mxu0 0
    %862 = vmatprep.subr.bf16.mxu0 0
    %863 = vmatpush2.bf16.msra.mxu0 0
    %864 = vmatprep.subr.bf16.mxu0 0
    %865 = vmatpush2.bf16.msra.mxu0 0
    %866 = vmatprep.subr.bf16.mxu0 0
    %867 = vmatpush2.bf16.msra.mxu0 0
    %868 = vmatprep.mubr.bf16.mxu0 0
    %869 = vmatmul.mubr.bf16.gmra.mxu0 %v834
    %v870 = vpop.f32.mrf.mxu0
    %v871 = vadd.f32 0.0, %v870
    %v872 = vpop.f32.mrf.mxu0
    %v873 = vpop.f32.mrf.mxu0
    %v874 = vpop.f32.mrf.mxu0
    %875 = vdwg.mxu0
    %v877 = vrot.slane %v871, 4
    %v879 = vadd.f32 %v148, %v877
    %v880 = vtanh.pop %v879
    %v881 = vpack.c.bf16 %v880, %v880
    %v883 = vrot.slane %v881, 2
    %885 = vmatprep.subr.bf16.mxu0 0
    %886 = vmatpush1.bf16.msra.mxu0 %v208
    %887 = vmatprep.subr.bf16.mxu0 0
    %888 = vmatpush1.bf16.msra.mxu0 %v207
    %889 = vmatprep.subr.bf16.mxu0 0
    %890 = vmatpush1.bf16.msra.mxu0 %v206
    %891 = vmatprep.subr.bf16.mxu0 0
    %892 = vmatpush1.bf16.msra.mxu0 %v205
    %893 = vmatprep.subr.bf16.mxu0 0
    %894 = vmatpush1.bf16.msra.mxu0 %v204
    %895 = vmatprep.subr.bf16.mxu0 0
    %896 = vmatpush1.bf16.msra.mxu0 %v203
    %897 = vmatprep.subr.bf16.mxu0 0
    %898 = vmatpush1.bf16.msra.mxu0 %v202
    %899 = vmatprep.subr.bf16.mxu0 0
    %900 = vmatpush1.bf16.msra.mxu0 %v201
    %901 = vmatprep.subr.bf16.mxu0 0
    %902 = vmatpush2.bf16.msra.mxu0 0
    %903 = vmatprep.subr.bf16.mxu0 0
    %904 = vmatpush2.bf16.msra.mxu0 0
    %905 = vmatprep.subr.bf16.mxu0 0
    %906 = vmatpush2.bf16.msra.mxu0 0
    %907 = vmatprep.subr.bf16.mxu0 0
    %908 = vmatpush2.bf16.msra.mxu0 0
    %909 = vmatprep.subr.bf16.mxu0 0
    %910 = vmatpush2.bf16.msra.mxu0 0
    %911 = vmatprep.subr.bf16.mxu0 0
    %912 = vmatpush2.bf16.msra.mxu0 0
    %913 = vmatprep.subr.bf16.mxu0 0
    %914 = vmatpush2.bf16.msra.mxu0 0
    %915 = vmatprep.subr.bf16.mxu0 0
    %916 = vmatpush2.bf16.msra.mxu0 0
    %917 = vmatprep.mubr.bf16.mxu0 0
    %918 = vmatmul.mubr.bf16.gmra.mxu0 %v883
    %v919 = vpop.f32.mrf.mxu0
    %v920 = vadd.f32 0.0, %v919
    %v921 = vpop.f32.mrf.mxu0
    %v922 = vpop.f32.mrf.mxu0
    %v923 = vpop.f32.mrf.mxu0
    %924 = vdwg.mxu0
    %v926 = vrot.slane %v920, 2
    %v928 = vadd.f32 %v148, %v926
    %v929 = vtanh.pop %v928
    %v930 = vld [vmem:[%s4] sm:$0xff]
    %v931 = vld [vmem:[%s4 + $0x8] sm:$0xff]
    %v932 = vld [vmem:[%s4 + $0x10] sm:$0xff]
    %v933 = vld [vmem:[%s4 + $0x18] sm:$0xff]
    %v934 = vld [vmem:[%s4 + $0x20] sm:$0xff]
    %v935 = vld [vmem:[%s4 + $0x28] sm:$0xff]
    %v936 = vld [vmem:[%s4 + $0x30] sm:$0xff]
    %v937 = vld [vmem:[%s4 + $0x38] sm:$0xff]
    %v938 = vld [vmem:[%s4 + $0x40] sm:$0xff]
    %v939 = vld [vmem:[%s4 + $0x48] sm:$0xff]
    %v940 = vld [vmem:[%s4 + $0x50] sm:$0xff]
    %v941 = vld [vmem:[%s4 + $0x58] sm:$0xff]
    %v942 = vld [vmem:[%s4 + $0x60] sm:$0xff]
    %v943 = vld [vmem:[%s4 + $0x68] sm:$0xff]
    %v944 = vld [vmem:[%s4 + $0x70] sm:$0xff]
    %v945 = vld [vmem:[%s4 + $0x78] sm:$0xff]
    %v946 = vld [vmem:[%s5] sm:$0x1]
    %v948 = vlaneseq
    %v949 = vshrl.u32 %v948, 7
    %v950 = vsub.s32 0, %v949
    %v951 = vrot.slane %v946, %v950
    %v954 = vrot.slane %v929, 6
    %956 = vmatprep.subr.mxu0 0.0
    %957 = vmatpush1.msra.mxu0 %v945
    %958 = vmatprep.subr.mxu0 0.0
    %959 = vmatpush1.msra.mxu0 %v944
    %960 = vmatprep.subr.mxu0 0.0
    %961 = vmatpush1.msra.mxu0 %v943
    %962 = vmatprep.subr.mxu0 0.0
    %963 = vmatpush1.msra.mxu0 %v942
    %964 = vmatprep.subr.mxu0 0.0
    %965 = vmatpush1.msra.mxu0 %v941
    %966 = vmatprep.subr.mxu0 0.0
    %967 = vmatpush1.msra.mxu0 %v940
    %968 = vmatprep.subr.mxu0 0.0
    %969 = vmatpush1.msra.mxu0 %v939
    %970 = vmatprep.subr.mxu0 0.0
    %971 = vmatpush1.msra.mxu0 %v938
    %972 = vmatprep.subr.mxu0 0.0
    %973 = vmatpush1.msra.mxu0 %v937
    %974 = vmatprep.subr.mxu0 0.0
    %975 = vmatpush1.msra.mxu0 %v936
    %976 = vmatprep.subr.mxu0 0.0
    %977 = vmatpush1.msra.mxu0 %v935
    %978 = vmatprep.subr.mxu0 0.0
    %979 = vmatpush1.msra.mxu0 %v934
    %980 = vmatprep.subr.mxu0 0.0
    %981 = vmatpush1.msra.mxu0 %v933
    %982 = vmatprep.subr.mxu0 0.0
    %983 = vmatpush1.msra.mxu0 %v932
    %984 = vmatprep.subr.mxu0 0.0
    %985 = vmatpush1.msra.mxu0 %v931
    %986 = vmatprep.subr.mxu0 0.0
    %987 = vmatpush1.msra.mxu0 %v930
    %988 = vmatprep.subr.mxu0 0.0
    %989 = vmatpush2.msra.mxu0 0.0
    %990 = vmatprep.subr.mxu0 0.0
    %991 = vmatpush2.msra.mxu0 0.0
    %992 = vmatprep.subr.mxu0 0.0
    %993 = vmatpush2.msra.mxu0 0.0
    %994 = vmatprep.subr.mxu0 0.0
    %995 = vmatpush2.msra.mxu0 0.0
    %996 = vmatprep.subr.mxu0 0.0
    %997 = vmatpush2.msra.mxu0 0.0
    %998 = vmatprep.subr.mxu0 0.0
    %999 = vmatpush2.msra.mxu0 0.0
    %1000 = vmatprep.subr.mxu0 0.0
    %1001 = vmatpush2.msra.mxu0 0.0
    %1002 = vmatprep.subr.mxu0 0.0
    %1003 = vmatpush2.msra.mxu0 0.0
    %1004 = vmatprep.subr.mxu0 0.0
    %1005 = vmatpush2.msra.mxu0 0.0
    %1006 = vmatprep.subr.mxu0 0.0
    %1007 = vmatpush2.msra.mxu0 0.0
    %1008 = vmatprep.subr.mxu0 0.0
    %1009 = vmatpush2.msra.mxu0 0.0
    %1010 = vmatprep.subr.mxu0 0.0
    %1011 = vmatpush2.msra.mxu0 0.0
    %1012 = vmatprep.subr.mxu0 0.0
    %1013 = vmatpush2.msra.mxu0 0.0
    %1014 = vmatprep.subr.mxu0 0.0
    %1015 = vmatpush2.msra.mxu0 0.0
    %1016 = vmatprep.subr.mxu0 0.0
    %1017 = vmatpush2.msra.mxu0 0.0
    %1018 = vmatprep.subr.mxu0 0.0
    %1019 = vmatpush2.msra.mxu0 0.0
    %1020 = vmatprep.mubr.f32.mxu0 0.0
    %1021 = vmatmul.mubr.f32.gmra.mxu0 %v954
    %v1022 = vpop.f32.mrf.mxu0
    %v1023 = vadd.f32 %v951, %v1022
    %v1024 = vpop.f32.mrf.mxu0
    %1025 = vdwg.mxu0
    %vm1026 = vcmask 9216
    %1027 = vst.msk [vmem:[#allocation2] sm:$0x3] %vm1026, %v1023
    // Predicated region
    $region26: #{char_rnn_forward.1} parent=1 // pred_check
      _
    $region27: #{char_rnn_forward.1} parent=1 // pred_check_branch
      %1029 = sbr.rel (0) target = $region29
    $region28: #{char_rnn_forward.1} parent=1 // pred_region
      %s1031 = ssub.s32 32, 32
      %1032 = vsyncadd [#allocation3], %s1031
      %s1034 = sshll.u32 [#allocation2], 4
      %s1035 = int_to_ptr.vmem [resolvable:$true] %s1034
      %1037 = dma.vmem_to_hbm [thread:$0]  %s1035, 32, %s6, [#allocation3]
    $region29: #{char_rnn_forward.1} parent=1 // pred_fallthru
      _
    // Predicated region
    $region30: #{char_rnn_forward.1} parent=1 // pred_check
      _
    $region31: #{char_rnn_forward.1} parent=1 // pred_check_branch
      %1039 = sbr.rel (0) target = $region33
    $region32: #{char_rnn_forward.1} parent=1 // pred_region
      %1040 = dma.done [#allocation3], 32
    $region33: #{char_rnn_forward.1} parent=1 // pred_fallthru
      _
    %1041 = vsyncpa [#allocation3], 1

</llo_original>
